<compile_context>
chip_gen: v7x
topology: tpu7x:2x2x1
jax: 0.10.0
libtpu: 0.0.40
codegen_flags: <defaults>
</compile_context>

<pallas_src>
import math

import jax
import jax.numpy as jnp
from jax.experimental import pallas as pl
from jax.experimental.pallas import tpu as pltpu


def _build_pe(emb: int, max_len: int = 3000, dtype=jnp.float32) -> jnp.ndarray:
    """Precompute the sinusoidal positional table (host-side, one time)."""
    if emb % 2 != 0:
        # The reference PyTorch module also fails for odd emb (shape mismatch on cos).
        raise ValueError(f"PositionalEncoding requires even emb, got {emb}")
    position = jnp.arange(max_len, dtype=jnp.float32)[:, None]            # (max_len, 1)
    div_term = jnp.exp(
        jnp.arange(0, emb, 2, dtype=jnp.float32) * (-math.log(10000.0) / emb)
    )                                                                      # (emb//2,)
    sin = jnp.sin(position * div_term)                                     # (max_len, emb//2)
    cos = jnp.cos(position * div_term)                                     # (max_len, emb//2)
    # Interleave: pe[:, 0::2] = sin, pe[:, 1::2] = cos
    pe = jnp.stack([sin, cos], axis=-1).reshape(max_len, emb)              # (max_len, emb)
    return pe.astype(dtype)


def _add_pe_kernel(x_ref, pe_ref, o_ref):
    # Exact-shape 2D tiles (rows, lanes): 2 vld + 1 vadd + 1 vst per vreg.
    o_ref[...] = x_ref[...] + pe_ref[...]


def _tile_budget_bytes() -> int:
    """Per-buffer tile budget, generation-aware."""
    try:
        kind = jax.devices()[0].device_kind.lower()
    except Exception:
        return 1 << 20
    if "v7" in kind or "7x" in kind:
        return 1 << 22      # 4 MiB: at ~3.2 TB/s the ~0.35 us step overhead is costly
    if "v6" in kind:
        return 1 << 21      # 2 MiB: ~86-90% of HBM roofline on measured f32 add
    return 1 << 20          # 1 MiB: plenty at <=1.4 TB/s, tiny vs. scoped VMEM


def _sublane_align(dtype) -> int:
    # Native sublane packing: 8 rows/vreg for 32-bit, 16 for bf16, 32 for 8-bit.
    return max(8, 32 // jnp.dtype(dtype).itemsize)


def _pick_rows(total_rows: int, row_bytes: int, align: int, budget: int) -> int:
    """Row-tile size: ~budget bytes per buffer, multiple of `align`, or full dim."""
    if total_rows <= align:
        return total_rows                      # full dim is always a legal block size
    rows = max(align, budget // max(row_bytes, 1))
    if rows >= total_rows:
        return total_rows
    return max(align, (rows // align) * align)


def _split_if_single_block(tr: int, total_rows: int, bs: int, align: int) -> int:
    """If the whole grid would be one block, halve the row tile so both v7x
    TensorCores get work (harmless ~0.35 us extra elsewhere)."""
    if bs == 1 and tr >= total_rows and total_rows >= 2 * align:
        half = -(-total_rows // 2)                               # ceil(total/2)
        return max(align, ((half + align - 1) // align) * align)
    return tr


def positional_encoding(
    x: jnp.ndarray,
    pe_full: jnp.ndarray,
    *,
    lane_dense_reshape: bool = False,
) -> jnp.ndarray:
    """Adds positional encoding to x of shape (bs, n, emb)."""
    bs, n, emb = x.shape
    max_len = pe_full.shape[0]
    if n > max_len:
        raise ValueError(f"sequence length {n} exceeds positional table max_len {max_len}")
    if pe_full.shape[1] != emb:
        raise ValueError(f"pe emb {pe_full.shape[1]} does not match x emb {emb}")

    pe = pe_full if pe_full.dtype == x.dtype else pe_full.astype(x.dtype)
    itemsize = jnp.dtype(x.dtype).itemsize
    align = _sublane_align(x.dtype)
    budget = _tile_budget_bytes()
    cost = pl.CostEstimate(
        flops=bs * n * emb,
        transcendentals=0,
        bytes_accessed=(2 * bs + 1) * n * emb * itemsize,
    )
    cparams = pltpu.CompilerParams(
        dimension_semantics=("parallel", "parallel"),
        # 3 blocks x 2 pipeline buffers x <=4 MiB tiles = <=24 MiB; raise the
        # scoped limit so that fits everywhere (below v7x's 64 MiB physical).
        vmem_limit_bytes=32 * 1024 * 1024,
    )

    def _call(x_in, pe_in, rows, lanes, out_rows):
        tr = _pick_rows(rows, lanes * itemsize, align, budget)
        tr = _split_if_single_block(tr, rows, bs, align)
        grid = (pl.cdiv(rows, tr), bs)      # batch innermost -> pe DMA'd once per row tile
        return pl.pallas_call(
            _add_pe_kernel,
            out_shape=jax.ShapeDtypeStruct((bs, out_rows, lanes), x.dtype),
            grid_spec=pltpu.PrefetchScalarGridSpec(
                num_scalar_prefetch=0,
                grid=grid,
                in_specs=[
                    pl.BlockSpec((None, tr, lanes), lambda t, b: (b, t, 0)),  # x, batch squeezed
                    pl.BlockSpec((tr, lanes), lambda t, b: (t, 0)),           # pe, batch-invariant
                ],
                out_specs=pl.BlockSpec((None, tr, lanes), lambda t, b: (b, t, 0)),
            ),
            compiler_params=cparams,
            cost_estimate=cost,
            input_output_aliases={0: 0},    # callers may donate x
        )(x_in, pe_in)

    if lane_dense_reshape and emb % 128 != 0 and (n * emb) % 128 == 0:
        # Optional path for emb < 128: view (n, emb) as rows of 128 lanes so the
        # output store is a full-width unmasked vst.  Only worthwhile if these
        # reshapes do not force a relayout copy (ideally the producer already
        # emits the flattened layout); otherwise the extra HBM read+write costs
        # more than the lane-dense store saves.
        # TODO(synk): have the producer emit (bs, n*emb//128, 128) directly.
        lane = 128
        rows = (n * emb) // lane
        x_v = x.reshape(bs, rows, lane)
        pe_v = pe[:n].reshape(rows, lane)
        out = _call(x_v, pe_v, rows, lane, rows)
        return out.reshape(bs, n, emb)

    # Default path: natural (bs, n, emb) layout, no wrapper reshapes.  Lane-dense
    # automatically when emb % 128 == 0; for emb < 128 the stores are masked but
    # no relayout copy is introduced around a purely memory-bound op.  pe_full is
    # passed un-sliced: the grid only touches the first ceil(n/tr) row tiles and
    # padded rows in a partial last tile are discarded by the masked store.
    return _call(x, pe, n, emb, n)


if __name__ == "__main__":
    # Small shapes consistent with the module's forward: (bs, n, emb)
    bs, n, emb = 2, 8, 32
    max_len = 3000

    key = jax.random.PRNGKey(0)
    x = jax.random.normal(key, (bs, n, emb), dtype=jnp.float32)
    pe_full = _build_pe(emb, max_len, dtype=x.dtype)

    # Reference first: x is aliased into the kernel output, so do not rely on
    # its buffer after the call if a caller chooses to donate it.
    ref = x + pe_full[None, :n, :]

    out = jax.block_until_ready(positional_encoding(x, pe_full))
    assert out.shape == (bs, n, emb)
    assert jnp.allclose(out, ref, atol=1e-6), "mismatch vs reference (natural-layout path)"

    # Also exercise the optional flattened lane-dense path (n*emb % 128 == 0 here).
    x2 = jax.random.normal(key, (bs, n, emb), dtype=jnp.float32)
    out2 = jax.block_until_ready(positional_encoding(x2, pe_full, lane_dense_reshape=True))
    assert jnp.allclose(out2, ref, atol=1e-6), "mismatch vs reference (lane-dense path)"

    print("KERNEL_OK")
</pallas_src>

<mosaic_0001>
module attributes {stable_mosaic.version = 11 : i64} {
  func.func @_add_pe_kernel(%arg0: i32, %arg1: i32, %arg2: memref<1x8x32xf32, #tpu.memory_space<vmem>>, %arg3: memref<8x32xf32, #tpu.memory_space<vmem>>, %arg4: memref<1x8x32xf32, #tpu.memory_space<vmem>>) attributes {dimension_semantics = [#tpu.dimension_semantics<parallel>, #tpu.dimension_semantics<parallel>], iteration_bounds = array<i64: 1, 2>, scalar_prefetch = 0 : i64, scratch_operands = 0 : i64, tpu.core_type = #tpu.core_type<tc>, window_params = [{transform_indices = @transform_0, window_bounds = array<i64: 1, 8, 32>}, {transform_indices = @transform_1, window_bounds = array<i64: 8, 32>}, {transform_indices = @transform_2, window_bounds = array<i64: 1, 8, 32>}]} {
    %c0 = arith.constant 0 : index
    %c0_0 = arith.constant 0 : index
    %c0_1 = arith.constant 0 : index
    %0 = vector.load %arg2[%c0, %c0_0, %c0_1] : memref<1x8x32xf32, #tpu.memory_space<vmem>>, vector<1x8x32xf32>
    %1 = vector.shape_cast %0 : vector<1x8x32xf32> to vector<8x32xf32>
    %c0_2 = arith.constant 0 : index
    %c0_3 = arith.constant 0 : index
    %2 = vector.load %arg3[%c0_2, %c0_3] : memref<8x32xf32, #tpu.memory_space<vmem>>, vector<8x32xf32>
    %3 = arith.addf %1, %2 : vector<8x32xf32>
    %c0_4 = arith.constant 0 : index
    %c0_5 = arith.constant 0 : index
    %c0_6 = arith.constant 0 : index
    %4 = vector.load %arg4[%c0_4, %c0_5, %c0_6] : memref<1x8x32xf32, #tpu.memory_space<vmem>>, vector<1x8x32xf32>
    %5 = vector.shape_cast %4 : vector<1x8x32xf32> to vector<8x32xf32>
    %6 = vector.shape_cast %3 : vector<8x32xf32> to vector<1x8x32xf32>
    tpu.vector_store %arg4[%c0_4, %c0_5, %c0_6], %6 {strides = array<i32>} : memref<1x8x32xf32, #tpu.memory_space<vmem>>, vector<1x8x32xf32>,
    return
  }
  func.func @transform_0(%arg0: i32, %arg1: i32) -> (i32, i32, i32) {
    %c0_i32 = arith.constant 0 : i32
    %c0_i32_0 = arith.constant 0 : i32
    return %arg1, %arg0, %c0_i32 : i32, i32, i32
  }
  func.func @transform_1(%arg0: i32, %arg1: i32) -> (i32, i32) {
    %c0_i32 = arith.constant 0 : i32
    %c0_i32_0 = arith.constant 0 : i32
    return %arg0, %c0_i32 : i32, i32
  }
  func.func @transform_2(%arg0: i32, %arg1: i32) -> (i32, i32, i32) {
    %c0_i32 = arith.constant 0 : i32
    %c0_i32_0 = arith.constant 0 : i32
    return %arg1, %arg0, %c0_i32 : i32, i32, i32
  }
}

</mosaic_0001>

<llo_original>
// kernel: tpu_custom_call.1
$region0: #{tpu_custom_call.1}
  #allocation0 [shape = 'u32[]', space=smem, size = 0x4, offset = 0x4, fixed_abs, tag = 'smem constant byte address 0x4 - core index']
  #allocation1 [shape = 'u32[144,128]{1,0:T(1,128)}', space=vmem, size = 0x12000, scoped, tag = 'internal scratch']
  %s0 = inlined_call_operand.hbm [shape: f32[2,8,32], index: 0, kind: input, shape index: {}, may-alias: {0,2}]
  %s1 = inlined_call_operand.vmem [shape: f32[3000,32], index: 1, kind: input, shape index: {}]
  %s2 = inlined_call_operand.hbm [shape: f32[2,8,32], index: 2, kind: output, shape index: {}, may-alias: {0,2}]
  %s3 = sld [smem:[#allocation0]]
  $region45: #{tpu_custom_call.1} parent=0
    _
  %s5 = ssub.s32 1, %s3
  %s6 = scalar_select 0, %s5, %s3
  $region1: #{tpu_custom_call.1} parent=0
    #allocation2 [shape = 'u8[8192]{0}', space=vmem, size = 0x2000, scoped, tag = 'input window, operand 0']
    #allocation3 [shape = 's32[2]{0}', space=sflag, size = 0x8, scoped, tag = 'scoped memory for tpu_custom_call.1']
    #allocation4 [shape = 's32[2]{0}', space=sflag, size = 0x8, scoped, tag = 'scoped memory for tpu_custom_call.1']
    #allocation5 [shape = 'u8[8192]{0}', space=vmem, size = 0x2000, scoped, tag = 'output window, operand 0']
    %7 = vsyncpa [#allocation3], 0
    %s8 = scalar_lea.sflag [#allocation3], 1
    %9 = vsyncpa %s8, 0
    %10 = vsyncpa [#allocation4], 0
    %s11 = scalar_lea.sflag [#allocation4], 1
    %12 = vsyncpa %s11, 0
    loop: start=0, step=1, limit=4
    $region2: #{tpu_custom_call.1} parent=1 // loop_pre_header
      _
    $region3: #{tpu_custom_call.1} parent=1 // loop_header
      %s14 = sphi 0, %s18
      %p15 = scmp.ge.s32.totalorder %s14, 4
      %s21 = sphi 0, %s33
      %s22 = sphi 0, %s29
      %s23 = sphi 0, %s21
      %s24 = sphi 0, %s22
      %s25 = sphi 0, %s23
      %s26 = sphi 0, %s24
      %s38 = sphi 0, %s40
      %s41 = sphi 0, %s38
      %s42 = sphi 0, %s41
      %s58 = sphi 0, %s42
      %s64 = sphi 0, %s66
      %s67 = sphi 0, %s64
      %s68 = sphi 0, %s67
      %s84 = sphi 0, %s68
      %s92 = sphi 0, %s94
      %s95 = sphi 0, %s92
      %s96 = sphi 0, %s95
      %s112 = sphi 0, %s96
    $region4: #{tpu_custom_call.1} parent=1 // loop_header_branch
      %17 = sbr.rel (%p15) target = $region8
    $region5: #{tpu_custom_call.1} parent=1 // loop_body
      %s19 = ssub.s32 %s14, 1
      %s20 = ssub.s32 %s14, 2
      %s27 = sadd.s32 1, %s22
      %p28 = scmp.ge.s32.totalorder %s27, 2
      %s29 = scalar_select %p28, 0, %s27
      %s30 = sadd.s32 1, %s21
      %s31 = scalar_select %p28, %s30, %s21
      %p32 = scmp.ge.s32.totalorder %s31, 1
      %s33 = scalar_select %p32, 0, %s31
      %s34 = ssub.s32 %s22, %s29
      %s35 = ssub.s32 %s21, %s33
      %s36 = sor.u32 %s34, %s35
      %p37 = scmp.eq.s32.totalorder %s36, 0
      %s39 = sadd.s32 %s38, 1
      %s40 = scalar_select %p37, %s38, %s39
      %p43 = pneg %p37
      %p44 = scmp.eq.s32.totalorder %s14, 1
      %p45 = por %p43, %p44
      %p46 = scmp.ne.s32.totalorder %s38, %s41
      %p47 = scmp.eq.s32.totalorder %s14, 0
      %p48 = por %p46, %p47
      %p49 = scmp.ne.s32.totalorder %s38, %s41
      %p50 = scmp.eq.s32.totalorder %s19, 1
      %p51 = por %p49, %p50
      %p52 = scmp.ne.s32.totalorder %s41, %s42
      %p53 = scmp.eq.s32.totalorder %s19, 0
      %p54 = por %p52, %p53
      %p55 = scmp.ne.s32.totalorder %s41, %s42
      %p56 = scmp.eq.s32.totalorder %s20, 1
      %p57 = por %p55, %p56
      %p59 = scmp.ne.s32.totalorder %s42, %s58
      %p60 = scmp.eq.s32.totalorder %s20, 0
      %p61 = por %p59, %p60
      %s62 = ssub.s32 %s21, %s33
      %p63 = scmp.eq.s32.totalorder %s62, 0
      %s65 = sadd.s32 %s64, 1
      %s66 = scalar_select %p63, %s64, %s65
      %p69 = pneg %p63
      %p70 = scmp.eq.s32.totalorder %s14, 1
      %p71 = por %p69, %p70
      %p72 = scmp.ne.s32.totalorder %s64, %s67
      %p73 = scmp.eq.s32.totalorder %s14, 0
      %p74 = por %p72, %p73
      %p75 = scmp.ne.s32.totalorder %s64, %s67
      %p76 = scmp.eq.s32.totalorder %s19, 1
      %p77 = por %p75, %p76
      %p78 = scmp.ne.s32.totalorder %s67, %s68
      %p79 = scmp.eq.s32.totalorder %s19, 0
      %p80 = por %p78, %p79
      %p81 = scmp.ne.s32.totalorder %s67, %s68
      %p82 = scmp.eq.s32.totalorder %s20, 1
      %p83 = por %p81, %p82
      %p85 = scmp.ne.s32.totalorder %s68, %s84
      %p86 = scmp.eq.s32.totalorder %s20, 0
      %p87 = por %p85, %p86
      %s88 = ssub.s32 %s22, %s29
      %s89 = ssub.s32 %s21, %s33
      %s90 = sor.u32 %s88, %s89
      %p91 = scmp.eq.s32.totalorder %s90, 0
      %s93 = sadd.s32 %s92, 1
      %s94 = scalar_select %p91, %s92, %s93
      %p97 = pneg %p91
      %p98 = scmp.eq.s32.totalorder %s14, 1
      %p99 = por %p97, %p98
      %p100 = scmp.ne.s32.totalorder %s92, %s95
      %p101 = scmp.eq.s32.totalorder %s14, 0
      %p102 = por %p100, %p101
      %p103 = scmp.ne.s32.totalorder %s92, %s95
      %p104 = scmp.eq.s32.totalorder %s19, 1
      %p105 = por %p103, %p104
      %p106 = scmp.ne.s32.totalorder %s95, %s96
      %p107 = scmp.eq.s32.totalorder %s19, 0
      %p108 = por %p106, %p107
      %p109 = scmp.ne.s32.totalorder %s95, %s96
      %p110 = scmp.eq.s32.totalorder %s20, 1
      %p111 = por %p109, %p110
      %p113 = scmp.ne.s32.totalorder %s96, %s112
      %p114 = scmp.eq.s32.totalorder %s20, 0
      %p115 = por %p113, %p114
      %p116 = scmp.le.s32.totalorder 1, %s14
      %p117 = scmp.lt.s32.totalorder %s14, 3
      %p118 = pnand %p116, %p117
      %p119 = pneg %p118
      // Predicated region
      $region9: #{tpu_custom_call.1} parent=5 // pred_check
        _
      $region10: #{tpu_custom_call.1} parent=5 // pred_check_branch
        %121 = sbr.rel (%p118) target = $region12
      $region11: #{tpu_custom_call.1} parent=5 // pred_region
        %s122 = ssub.s32 %s14, 1
        // Predicated region
        $region13: #{tpu_custom_call.1} parent=11 // pred_check
          %p123 = pneg %p80
        $region14: #{tpu_custom_call.1} parent=11 // pred_check_branch
          %125 = sbr.rel (%p123) target = $region16
        $region15: #{tpu_custom_call.1} parent=11 // pred_region
          %p126 = scmp.lt.s32.totalorder %s23, 374
          %s127 = scalar_select %p126, %s23, 374
          %s128 = smul.addr %s127, 8
          %s129 = scalar_lea.vmem %s1, %s128
        $region16: #{tpu_custom_call.1} parent=11 // pred_fallthru
          _
      $region12: #{tpu_custom_call.1} parent=5 // pred_fallthru
        _
      %p130 = scmp.lt.s32.totalorder %s14, 2
      // Predicated region
      $region17: #{tpu_custom_call.1} parent=5 // pred_check
        %p131 = pneg %p130
      $region18: #{tpu_custom_call.1} parent=5 // pred_check_branch
        %133 = sbr.rel (%p131) target = $region20
      $region19: #{tpu_custom_call.1} parent=5 // pred_region
        // Predicated region
        $region21: #{tpu_custom_call.1} parent=19 // pred_check
          %p134 = pneg %p48
        $region22: #{tpu_custom_call.1} parent=19 // pred_check_branch
          %136 = sbr.rel (%p134) target = $region24
        $region23: #{tpu_custom_call.1} parent=19 // pred_region
          %s137 = sand.u32 %s38, 1
          %s138 = scalar_lea.sflag [#allocation3], %s137
          %s139 = sand.u32 %s38, 1
          %s140 = smul.addr %s139, 8
          %s141 = scalar_lea.vmem [#allocation2], %s140
          %s143 = ssub.s32 128, 128
          %144 = vsyncadd %s138, %s143
          %s145 = sadd.s32 %s21, %s22
          %s146 = smul.addr %s145, 128
          %s147 = scalar_lea.hbm %s0, %s146
          %s149 = sshll.u32 %s141, 4
          %s150 = int_to_ptr.vmem [resolvable:$true] %s149
          %152 = dma.hbm_to_vmem [thread:$0]  %s147, 128, %s150, %s138
        $region24: #{tpu_custom_call.1} parent=19 // pred_fallthru
          _
      $region20: #{tpu_custom_call.1} parent=5 // pred_fallthru
        _
      %p153 = scmp.le.s32.totalorder 1, %s14
      %p154 = scmp.lt.s32.totalorder %s14, 3
      %p155 = pnand %p153, %p154
      %p156 = pneg %p155
      // Predicated region
      $region25: #{tpu_custom_call.1} parent=5 // pred_check
        _
      $region26: #{tpu_custom_call.1} parent=5 // pred_check_branch
        %158 = sbr.rel (%p155) target = $region28
      $region27: #{tpu_custom_call.1} parent=5 // pred_region
        %s159 = ssub.s32 %s14, 1
        %s160 = sand.u32 %s41, 1
        %s161 = scalar_lea.sflag [#allocation3], %s160
        %s162 = sand.u32 %s41, 1
        %s163 = smul.addr %s162, 8
        %s164 = scalar_lea.vmem [#allocation2], %s163
        // Predicated region
        $region29: #{tpu_custom_call.1} parent=27 // pred_check
          %p165 = pneg %p54
        $region30: #{tpu_custom_call.1} parent=27 // pred_check_branch
          %167 = sbr.rel (%p165) target = $region32
        $region31: #{tpu_custom_call.1} parent=27 // pred_region
          %168 = dma.done %s161, 128
        $region32: #{tpu_custom_call.1} parent=27 // pred_fallthru
          _
        %s169 = sand.u32 %s41, 1
        %s170 = scalar_lea.sflag [#allocation3], %s169
        %s171 = sand.u32 %s41, 1
        %s172 = smul.addr %s171, 8
        %s173 = scalar_lea.vmem [#allocation2], %s172
        %p174 = pneg %p54
        %p175 = pneg %p51
        %p176 = scmp.lt.s32.totalorder %s23, 374
        %s177 = scalar_select %p176, %s23, 374
        %s178 = smul.addr %s177, 8
        %s179 = scalar_lea.vmem %s1, %s178
        %p180 = pneg %p80
        %p181 = pneg %p77
        %p182 = pneg %p108
        %p183 = pneg %p105
        %s184 = sand.u32 %s95, 1
        %s185 = scalar_lea.sflag [#allocation4], %s184
        %s186 = sand.u32 %s95, 1
        %s187 = smul.addr %s186, 8
        %s188 = scalar_lea.vmem [#allocation5], %s187
        %p189 = scmp.lt.s32.totalorder %s23, 374
        %s190 = scalar_select %p189, %s23, 374
        %s191 = smul.addr %s190, 8
        %s192 = scalar_lea.vmem %s1, %s191
        %v193 = vld [vmem:[%s164] sm:$0xff]
        %v194 = vld [vmem:[%s192] sm:$0xff]
        %v195 = vadd.f32 %v193, %v194
        %vm196 = vcmask 261120
        %197 = vst.msk [vmem:[%s188] sm:$0xff] %vm196, %v195
        %s198 = sand.u32 %s95, 1
        %s199 = scalar_lea.sflag [#allocation4], %s198
        %s200 = sand.u32 %s95, 1
        %s201 = smul.addr %s200, 8
        %s202 = scalar_lea.vmem [#allocation5], %s201
        // Predicated region
        $region33: #{tpu_custom_call.1} parent=27 // pred_check
          %p203 = pneg %p105
        $region34: #{tpu_custom_call.1} parent=27 // pred_check_branch
          %205 = sbr.rel (%p203) target = $region36
        $region35: #{tpu_custom_call.1} parent=27 // pred_region
          %s207 = ssub.s32 128, 128
          %208 = vsyncadd %s199, %s207
          %s209 = sadd.s32 %s23, %s24
          %s210 = smul.addr %s209, 128
          %s211 = scalar_lea.hbm %s2, %s210
          %s213 = sshll.u32 %s202, 4
          %s214 = int_to_ptr.vmem [resolvable:$true] %s213
          %216 = dma.vmem_to_hbm [thread:$0]  %s214, 128, %s211, %s199
        $region36: #{tpu_custom_call.1} parent=27 // pred_fallthru
          _
      $region28: #{tpu_custom_call.1} parent=5 // pred_fallthru
        _
      %p217 = scmp.le.s32.totalorder 2, %s14
      // Predicated region
      $region37: #{tpu_custom_call.1} parent=5 // pred_check
        %p218 = pneg %p217
      $region38: #{tpu_custom_call.1} parent=5 // pred_check_branch
        %220 = sbr.rel (%p218) target = $region40
      $region39: #{tpu_custom_call.1} parent=5 // pred_region
        %s221 = ssub.s32 %s14, 2
        // Predicated region
        $region41: #{tpu_custom_call.1} parent=39 // pred_check
          %p222 = pneg %p111
        $region42: #{tpu_custom_call.1} parent=39 // pred_check_branch
          %224 = sbr.rel (%p222) target = $region44
        $region43: #{tpu_custom_call.1} parent=39 // pred_region
          %s225 = sand.u32 %s96, 1
          %s226 = scalar_lea.sflag [#allocation4], %s225
          %s227 = sand.u32 %s96, 1
          %s228 = smul.addr %s227, 8
          %s229 = scalar_lea.vmem [#allocation5], %s228
          %230 = dma.done %s226, 128
        $region44: #{tpu_custom_call.1} parent=39 // pred_fallthru
          _
      $region40: #{tpu_custom_call.1} parent=5 // pred_fallthru
        _
    $region6: #{tpu_custom_call.1} parent=1 // loop_footer
      %s18 = sadd.s32 1, %s14
    $region7: #{tpu_custom_call.1} parent=1 // loop_footer_branch
      %13 = sbr.rel target = $region3
    $region8: #{tpu_custom_call.1} parent=1 // loop_exit
      _
    %231 = vsyncpa [#allocation3], 1
    %s232 = scalar_lea.sflag [#allocation3], 1
    %233 = vsyncpa %s232, 1
    %234 = vsyncpa [#allocation4], 1
    %s235 = scalar_lea.sflag [#allocation4], 1
    %236 = vsyncpa %s235, 1

</llo_original>
